<compile_context>
chip_gen: v7x
topology: tpu7x:2x2x1
jax: 0.10.0
libtpu: 0.0.40
codegen_flags: <defaults>
</compile_context>

<pallas_src>
import numpy as np

import jax
import jax.numpy as jnp
from jax import lax
from jax.experimental import pallas as pl
from jax.experimental.pallas import tpu as pltpu

BN_EPS = 1e-5


def _round_up(x, m):
    return (x + m - 1) // m * m


# ----------------------------------------------------------------------------
# Pallas kernel: one fused forward pass per batch tile (bf16 operands, f32 acc).
# ----------------------------------------------------------------------------
def _connect_four_kernel(inp_ref, w0_ref, w1_ref, w2_ref, w3_ref, out_ref):
    f32 = jnp.float32
    bf16 = jnp.bfloat16
    inp = inp_ref[...]                                                  # (TB, 128) bf16

    # One lane-dense bf16 matmul: conv taps + all state/position/bias contributions.
    big = jnp.dot(inp, w0_ref[...], preferred_element_type=f32)        # (TB, 1408) f32

    # conv1 (+bias) -> 2x2 max-pool (max over the 4 tap groups) -> ReLU.
    # Eval-mode BatchNorm is folded into W1 / the W0 bias row at pack time.
    pooled = jnp.maximum(jnp.maximum(big[:, 0:256], big[:, 256:512]),
                         jnp.maximum(big[:, 512:768], big[:, 768:1024]))
    conv_act = jnp.maximum(pooled, 0.0).astype(bf16)                   # (TB,256), 180 active

    # conv slab -> (fc1 part | head part)
    m1 = jnp.dot(conv_act, w1_ref[...], preferred_element_type=f32)    # (TB, 256)
    fc1 = jnp.maximum(big[:, 1024:1152] + m1[:, 0:128], 0.0).astype(bf16)  # 80 active
    # fc1 -> (fc2 part | head part)
    m2 = jnp.dot(fc1, w2_ref[...], preferred_element_type=f32)         # (TB, 256)
    fc2 = jnp.maximum(big[:, 1152:1280] + m2[:, 0:128], 0.0).astype(bf16)  # 20 active
    # head (pre-activation) = state/pos part + conv part + fc1 part + fc2 part.
    head = (big[:, 1280:1408] + m1[:, 128:256] + m2[:, 128:256]
            + jnp.dot(fc2, w3_ref[...], preferred_element_type=f32))   # (TB, 128)
    # gameActivation (tanh assumed) is applied in glue on the (B,2) slice only.
    out_ref[...] = head


# ----------------------------------------------------------------------------
# Glue: fold the PyTorch parameters into packed lane-dense bf16 weight slabs.
# Call ONCE and reuse the result (hoisted out of the per-forward path).
# ----------------------------------------------------------------------------
def pack_params(params):
    f32 = jnp.float32
    conv_w = params['conv_w'].astype(f32)    # (20, 1, 3, 3)
    conv_b = params['conv_b'].astype(f32)    # (20,)
    w_fc1 = params['w_fc1'].astype(f32)      # (80, 182)
    b_fc1 = params['b_fc1'].astype(f32)
    w_fc2 = params['w_fc2'].astype(f32)      # (20, 82)
    b_fc2 = params['b_fc2'].astype(f32)
    w_fco = params['w_fco'].astype(f32)      # (2, 324)
    b_fco = params['b_fco'].astype(f32)

    # Dense conv-as-matmul embedding. E[r, t, p, k] = 1 iff flat input pixel r feeds
    # kernel tap k of the conv output position that is pool-tap t of pooled cell p.
    E = np.zeros((42, 4, 9, 9), dtype=np.float32)
    for t in range(4):
        th, tw = divmod(t, 2)
        for p in range(9):
            ph, pw = divmod(p, 3)
            h, w = 2 * ph + th, 2 * pw + tw            # conv-output position (H=7, W=6)
            for k in range(9):
                dh, dw = divmod(k, 3)
                hi, wi = h + dh - 1, w + dw - 1        # conv padding = 1
                if 0 <= hi < 7 and 0 <= wi < 6:
                    E[hi * 6 + wi, t, p, k] = 1.0
    wk = conv_w.reshape(20, 9)                                           # (c, kernel tap)
    conv_cols = jnp.einsum('rtpk,ck->rtcp', jnp.asarray(E), wk,
                           precision=lax.Precision.HIGHEST)              # (42, 4, 20, 9)
    conv_cols = jnp.pad(conv_cols.reshape(42, 4, 180),
                        ((0, 0), (0, 0), (0, 76))).reshape(42, 1024)
    # Conv bias is constant per channel, so folding it per tap group commutes with the pool.
    conv_bias_cols = jnp.tile(jnp.pad(jnp.repeat(conv_b, 9), (0, 76)), 4)    # (1024,)

    # Eval-mode BatchNorm folded as an affine on the 180 active conv columns.
    inv = 1.0 / jnp.sqrt(params['bn_var'].astype(f32) + BN_EPS)
    scale = params['bn_gamma'].astype(f32) * inv                         # (20,)
    shift = params['bn_beta'].astype(f32) - params['bn_mean'].astype(f32) * scale
    scale_col = jnp.repeat(scale, 9)                                     # (180,)
    shift_col = jnp.repeat(shift, 9)                                     # (180,)

    # conv slab -> (fc1 | head) weight, with the BN scale folded into its rows.
    W1a = jnp.zeros((180, 256), f32)
    W1a = W1a.at[:, 0:80].set(w_fc1[:, 2:182].T)
    W1a = W1a.at[:, 128:130].set(w_fco[:, 44:224].T)
    bn_bias = shift_col @ W1a                                            # constant (256,)
    W1 = jnp.zeros((256, 256), f32).at[0:180, :].set(scale_col[:, None] * W1a)

    # W0: rows = [state(2) | position(42) | ones(1) | zero pad to 128 lanes].
    W0 = jnp.zeros((128, 1408), f32)
    W0 = W0.at[2:44, 0:1024].set(conv_cols)
    W0 = W0.at[44, 0:1024].set(conv_bias_cols)
    W0 = W0.at[0:2, 1024:1104].set(w_fc1[:, 0:2].T)
    W0 = W0.at[44, 1024:1104].set(b_fc1)
    W0 = W0.at[0:2, 1152:1172].set(w_fc2[:, 0:2].T)
    W0 = W0.at[44, 1152:1172].set(b_fc2)
    W0 = W0.at[0:44, 1280:1282].set(w_fco[:, 0:44].T)
    W0 = W0.at[44, 1280:1282].set(b_fco)
    # Folded-BN constant contribution (shift @ W1a) -> fc1-bias and head-bias columns.
    W0 = W0.at[44, 1024:1152].add(bn_bias[0:128])
    W0 = W0.at[44, 1280:1408].add(bn_bias[128:256])

    # fc1 -> (fc2 | head), fc2 -> head.
    W2 = jnp.zeros((128, 256), f32)
    W2 = W2.at[0:80, 0:20].set(w_fc2[:, 2:82].T)
    W2 = W2.at[0:80, 128:130].set(w_fco[:, 224:304].T)
    W3 = jnp.zeros((128, 128), f32)
    W3 = W3.at[0:20, 0:2].set(w_fco[:, 304:324].T)

    bf16 = jnp.bfloat16
    return (W0.astype(bf16), W1.astype(bf16), W2.astype(bf16), W3.astype(bf16))


def _build_input(position, state, rows):
    """Lane-dense (rows, 128) bf16 input slab: [state(2) | position(42) | 1.0 | 0...]."""
    f32 = jnp.float32
    B = position.shape[0]
    inp = jnp.zeros((rows, 128), f32)
    inp = inp.at[:B, 0:2].set(state.astype(f32))
    inp = inp.at[:B, 2:44].set(position.astype(f32))
    inp = inp.at[:B, 44].set(1.0)
    return inp.astype(jnp.bfloat16)


def connect_four_forward(position, state, packed, *, block_b=1024):
    """position: (B, 42) (flattened (B,1,7,6) board); state: (B, 2); packed = pack_params(...)."""
    W0, W1, W2, W3 = packed
    B = position.shape[0]

    ALIGN = 16                      # bf16 sublane packing: batch tile multiple of 16
    Bp_min = _round_up(B, ALIGN)
    # Prefer >= 2 grid steps when the batch allows it (v7x has 2 TensorCores per chip).
    half = _round_up((Bp_min + 1) // 2, ALIGN)
    TB = _round_up(max(ALIGN, min(block_b, half)), ALIGN)
    Bp = _round_up(B, TB)

    inp = _build_input(position, state, Bp)                              # (Bp, 128) bf16

    out = pl.pallas_call(
        _connect_four_kernel,
        out_shape=jax.ShapeDtypeStruct((Bp, 128), jnp.float32),
        grid=(Bp // TB,),
        in_specs=[
            pl.BlockSpec((TB, 128), lambda i: (i, 0)),       # batch-tiled lane-dense input
            # Weights use constant index maps -> fetched once, reused across grid steps.
            pl.BlockSpec((128, 1408), lambda i: (0, 0)),     # W0 (conv taps + biases + BN bias)
            pl.BlockSpec((256, 256), lambda i: (0, 0)),      # W1 (conv->fc1|head, BN-scaled)
            pl.BlockSpec((128, 256), lambda i: (0, 0)),      # W2 (fc1->fc2|head)
            pl.BlockSpec((128, 128), lambda i: (0, 0)),      # W3 (fc2->head)
        ],
        out_specs=pl.BlockSpec((TB, 128), lambda i: (i, 0)), # lane-dense output slab
        compiler_params=pltpu.CompilerParams(
            dimension_semantics=("parallel",),
            vmem_limit_bytes=48 * 1024 * 1024),              # fits v7x 64 MiB physical VMEM
    )(inp, W0, W1, W2, W3)
    # TODO(synk): gameActivation is not defined in the provided source; tanh assumed.
    return jnp.tanh(out[:B, 0:2])


# ----------------------------------------------------------------------------
# Pure-JAX mirror of the kernel math (same packed weights, same bf16 cast points):
# tight check of the Pallas plumbing independent of f32-vs-bf16 numerics.
# ----------------------------------------------------------------------------
def packed_reference_forward(position, state, packed):
    W0, W1, W2, W3 = packed
    f32 = jnp.float32
    bf16 = jnp.bfloat16
    inp = _build_input(position, state, position.shape[0])
    big = jnp.dot(inp, W0, preferred_element_type=f32)
    pooled = jnp.maximum(jnp.maximum(big[:, 0:256], big[:, 256:512]),
                         jnp.maximum(big[:, 512:768], big[:, 768:1024]))
    conv_act = jnp.maximum(pooled, 0.0).astype(bf16)
    m1 = jnp.dot(conv_act, W1, preferred_element_type=f32)
    fc1 = jnp.maximum(big[:, 1024:1152] + m1[:, 0:128], 0.0).astype(bf16)
    m2 = jnp.dot(fc1, W2, preferred_element_type=f32)
    fc2 = jnp.maximum(big[:, 1152:1280] + m2[:, 0:128], 0.0).astype(bf16)
    head = (big[:, 1280:1408] + m1[:, 128:256] + m2[:, 128:256]
            + jnp.dot(fc2, W3, preferred_element_type=f32))
    return jnp.tanh(head[:, 0:2])


# ----------------------------------------------------------------------------
# Pure-JAX f32 reference (PyTorch conventions: NCHW, (c,h,w) flatten, torch.cat)
# ----------------------------------------------------------------------------
def reference_forward(position, state, params):
    B = position.shape[0]
    pos = position.reshape(B, 1, 7, 6)
    conv = lax.conv_general_dilated(
        pos, params['conv_w'], window_strides=(1, 1), padding=((1, 1), (1, 1)),
        dimension_numbers=('NCHW', 'OIHW', 'NCHW'), precision=lax.Precision.HIGHEST)
    conv = conv + params['conv_b'][None, :, None, None]
    pooled = lax.reduce_window(conv, -jnp.inf, lax.max, (1, 1, 2, 2), (1, 1, 2, 2), 'VALID')
    act = jnp.maximum(pooled, 0.0)                       # (B, 20, 3, 3)
    inv = 1.0 / jnp.sqrt(params['bn_var'] + BN_EPS)
    bn = ((act - params['bn_mean'][None, :, None, None])
          * (params['bn_gamma'] * inv)[None, :, None, None]
          + params['bn_beta'][None, :, None, None])
    flat_conv = bn.reshape(B, 180)
    dot = lambda a, b: jnp.dot(a, b, precision=lax.Precision.HIGHEST)
    fc1 = jnp.maximum(dot(jnp.concatenate([state, flat_conv], 1), params['w_fc1'].T)
                      + params['b_fc1'], 0.0)
    fc2 = jnp.maximum(dot(jnp.concatenate([state, fc1], 1), params['w_fc2'].T)
                      + params['b_fc2'], 0.0)
    final_inp = jnp.concatenate([state, position, flat_conv, fc1, fc2], 1)
    return jnp.tanh(dot(final_inp, params['w_fco'].T) + params['b_fco'])


def init_params(key):
    ks = jax.random.split(key, 12)
    f32 = jnp.float32
    return {
        'conv_w': 0.2 * jax.random.normal(ks[0], (20, 1, 3, 3), f32),
        'conv_b': 0.1 * jax.random.normal(ks[1], (20,), f32),
        'bn_gamma': 1.0 + 0.1 * jax.random.normal(ks[2], (20,), f32),
        'bn_beta': 0.1 * jax.random.normal(ks[3], (20,), f32),
        'bn_mean': 0.1 * jax.random.normal(ks[4], (20,), f32),
        'bn_var': 0.5 + jax.random.uniform(ks[5], (20,), f32),
        'w_fc1': 0.1 * jax.random.normal(ks[6], (80, 182), f32),
        'b_fc1': 0.1 * jax.random.normal(ks[7], (80,), f32),
        'w_fc2': 0.1 * jax.random.normal(ks[8], (20, 82), f32),
        'b_fc2': 0.1 * jax.random.normal(ks[9], (20,), f32),
        'w_fco': 0.1 * jax.random.normal(ks[10], (2, 324), f32),
        'b_fco': 0.1 * jax.random.normal(ks[11], (2,), f32),
    }


if __name__ == "__main__":
    key = jax.random.PRNGKey(0)
    kparam, kpos, kstate = jax.random.split(key, 3)
    params = init_params(kparam)

    # Pack once (hoisted out of the per-call path) and jit the forward.
    packed = pack_params(params)
    fwd = jax.jit(connect_four_forward, static_argnames=("block_b",))

    # Primary small case: batch=2, board (1,7,6) flattened to 42, state 2.
    B = 2
    position = jax.random.normal(kpos, (B, 42), jnp.float32)
    state = jax.random.normal(kstate, (B, 2), jnp.float32)
    out = jax.block_until_ready(fwd(position, state, packed))
    ref_f32 = jax.block_until_ready(reference_forward(position, state, params))
    ref_bf16 = jax.block_until_ready(packed_reference_forward(position, state, packed))
    assert out.shape == (B, 2) and out.dtype == jnp.float32
    assert bool(jnp.all(jnp.isfinite(out)))
    # Tight check: kernel vs identical-math bf16 reference (validates the Pallas kernel itself).
    err_tight = float(jnp.max(jnp.abs(out - ref_bf16)))
    assert err_tight < 5e-4, f"kernel vs packed bf16 reference mismatch (max abs err {err_tight})"
    # Loose check: bf16-operand kernel vs full-f32 reference (validates the weight packing;
    # tolerance is the expected bf16-vs-f32 numerical envelope for this net).
    err_loose = float(jnp.max(jnp.abs(out - ref_f32)))
    assert err_loose < 0.1, f"kernel vs f32 reference exceeds bf16 envelope (max abs err {err_loose})"

    # Second case: batch padding + multi-step grid (TB=16 -> grid=3 at B=37).
    B2 = 37
    k2p, k2s = jax.random.split(jax.random.PRNGKey(1), 2)
    position2 = jax.random.normal(k2p, (B2, 42), jnp.float32)
    state2 = jax.random.normal(k2s, (B2, 2), jnp.float32)
    out2 = jax.block_until_ready(fwd(position2, state2, packed, block_b=16))
    ref2_f32 = jax.block_until_ready(reference_forward(position2, state2, params))
    ref2_bf16 = jax.block_until_ready(packed_reference_forward(position2, state2, packed))
    assert out2.shape == (B2, 2) and bool(jnp.all(jnp.isfinite(out2)))
    err2_tight = float(jnp.max(jnp.abs(out2 - ref2_bf16)))
    assert err2_tight < 5e-4, f"tiled kernel vs packed bf16 reference mismatch ({err2_tight})"
    err2_loose = float(jnp.max(jnp.abs(out2 - ref2_f32)))
    assert err2_loose < 0.1, f"tiled kernel vs f32 reference exceeds bf16 envelope ({err2_loose})"

    print("KERNEL_OK")
</pallas_src>

<mosaic_0001>
module attributes {stable_mosaic.version = 11 : i64} {
  func.func @_connect_four_kernel(%arg0: i32, %arg1: memref<16x128xbf16, #tpu.memory_space<vmem>>, %arg2: memref<128x1408xbf16, #tpu.memory_space<vmem>>, %arg3: memref<256x256xbf16, #tpu.memory_space<vmem>>, %arg4: memref<128x256xbf16, #tpu.memory_space<vmem>>, %arg5: memref<128x128xbf16, #tpu.memory_space<vmem>>, %arg6: memref<16x128xf32, #tpu.memory_space<vmem>>) attributes {dimension_semantics = [#tpu.dimension_semantics<parallel>], iteration_bounds = array<i64: 1>, scalar_prefetch = 0 : i64, scratch_operands = 0 : i64, tpu.core_type = #tpu.core_type<tc>, window_params = [{transform_indices = @transform_0, window_bounds = array<i64: 16, 128>}, {pipeline_mode = #tpu.pipeline_mode<synchronous>, transform_indices = @transform_1, window_bounds = array<i64: 128, 1408>}, {pipeline_mode = #tpu.pipeline_mode<synchronous>, transform_indices = @transform_2, window_bounds = array<i64: 256, 256>}, {pipeline_mode = #tpu.pipeline_mode<synchronous>, transform_indices = @transform_3, window_bounds = array<i64: 128, 256>}, {pipeline_mode = #tpu.pipeline_mode<synchronous>, transform_indices = @transform_4, window_bounds = array<i64: 128, 128>}, {transform_indices = @transform_5, window_bounds = array<i64: 16, 128>}]} {
    %c0 = arith.constant 0 : index
    %c0_0 = arith.constant 0 : index
    %0 = vector.load %arg1[%c0, %c0_0] : memref<16x128xbf16, #tpu.memory_space<vmem>>, vector<16x128xbf16>
    %c0_1 = arith.constant 0 : index
    %c0_2 = arith.constant 0 : index
    %1 = vector.load %arg2[%c0_1, %c0_2] : memref<128x1408xbf16, #tpu.memory_space<vmem>>, vector<128x1408xbf16>
    %cst = arith.constant dense<0.000000e+00> : vector<16x1408xf32>
    %2 = tpu.matmul %0, %1, %cst {dimension_numbers = #tpu.dot_dimension_numbers<[1], [0], [0], [1], [0, 0, 1, 1], [], []>} : vector<16x128xbf16>, vector<128x1408xbf16>, vector<16x1408xf32> -> vector<16x1408xf32>
    %3 = vector.extract_strided_slice %2 {offsets = [0, 0], sizes = [16, 256], strides = [1, 1]} : vector<16x1408xf32> to vector<16x256xf32>
    %4 = vector.extract_strided_slice %2 {offsets = [0, 256], sizes = [16, 256], strides = [1, 1]} : vector<16x1408xf32> to vector<16x256xf32>
    %5 = arith.maximumf %3, %4 : vector<16x256xf32>
    %6 = vector.extract_strided_slice %2 {offsets = [0, 512], sizes = [16, 256], strides = [1, 1]} : vector<16x1408xf32> to vector<16x256xf32>
    %7 = vector.extract_strided_slice %2 {offsets = [0, 768], sizes = [16, 256], strides = [1, 1]} : vector<16x1408xf32> to vector<16x256xf32>
    %8 = arith.maximumf %6, %7 : vector<16x256xf32>
    %9 = arith.maximumf %5, %8 : vector<16x256xf32>
    %cst_3 = arith.constant 0.000000e+00 : f32
    %10 = vector.broadcast %cst_3 : f32 to vector<16x256xf32>
    %11 = arith.maximumf %9, %10 : vector<16x256xf32>
    %12 = arith.truncf %11 : vector<16x256xf32> to vector<16x256xbf16>
    %c0_4 = arith.constant 0 : index
    %c0_5 = arith.constant 0 : index
    %13 = vector.load %arg3[%c0_4, %c0_5] : memref<256x256xbf16, #tpu.memory_space<vmem>>, vector<256x256xbf16>
    %cst_6 = arith.constant dense<0.000000e+00> : vector<16x256xf32>
    %14 = tpu.matmul %12, %13, %cst_6 {dimension_numbers = #tpu.dot_dimension_numbers<[1], [0], [0], [1], [0, 0, 1, 1], [], []>} : vector<16x256xbf16>, vector<256x256xbf16>, vector<16x256xf32> -> vector<16x256xf32>
    %15 = vector.extract_strided_slice %2 {offsets = [0, 1024], sizes = [16, 128], strides = [1, 1]} : vector<16x1408xf32> to vector<16x128xf32>
    %16 = vector.extract_strided_slice %14 {offsets = [0, 0], sizes = [16, 128], strides = [1, 1]} : vector<16x256xf32> to vector<16x128xf32>
    %17 = arith.addf %15, %16 : vector<16x128xf32>
    %cst_7 = arith.constant 0.000000e+00 : f32
    %18 = vector.broadcast %cst_7 : f32 to vector<16x128xf32>
    %19 = arith.maximumf %17, %18 : vector<16x128xf32>
    %20 = arith.truncf %19 : vector<16x128xf32> to vector<16x128xbf16>
    %c0_8 = arith.constant 0 : index
    %c0_9 = arith.constant 0 : index
    %21 = vector.load %arg4[%c0_8, %c0_9] : memref<128x256xbf16, #tpu.memory_space<vmem>>, vector<128x256xbf16>
    %cst_10 = arith.constant dense<0.000000e+00> : vector<16x256xf32>
    %22 = tpu.matmul %20, %21, %cst_10 {dimension_numbers = #tpu.dot_dimension_numbers<[1], [0], [0], [1], [0, 0, 1, 1], [], []>} : vector<16x128xbf16>, vector<128x256xbf16>, vector<16x256xf32> -> vector<16x256xf32>
    %23 = vector.extract_strided_slice %2 {offsets = [0, 1152], sizes = [16, 128], strides = [1, 1]} : vector<16x1408xf32> to vector<16x128xf32>
    %24 = vector.extract_strided_slice %22 {offsets = [0, 0], sizes = [16, 128], strides = [1, 1]} : vector<16x256xf32> to vector<16x128xf32>
    %25 = arith.addf %23, %24 : vector<16x128xf32>
    %cst_11 = arith.constant 0.000000e+00 : f32
    %26 = vector.broadcast %cst_11 : f32 to vector<16x128xf32>
    %27 = arith.maximumf %25, %26 : vector<16x128xf32>
    %28 = arith.truncf %27 : vector<16x128xf32> to vector<16x128xbf16>
    %29 = vector.extract_strided_slice %2 {offsets = [0, 1280], sizes = [16, 128], strides = [1, 1]} : vector<16x1408xf32> to vector<16x128xf32>
    %30 = vector.extract_strided_slice %14 {offsets = [0, 128], sizes = [16, 128], strides = [1, 1]} : vector<16x256xf32> to vector<16x128xf32>
    %31 = arith.addf %29, %30 : vector<16x128xf32>
    %32 = vector.extract_strided_slice %22 {offsets = [0, 128], sizes = [16, 128], strides = [1, 1]} : vector<16x256xf32> to vector<16x128xf32>
    %33 = arith.addf %31, %32 : vector<16x128xf32>
    %c0_12 = arith.constant 0 : index
    %c0_13 = arith.constant 0 : index
    %34 = vector.load %arg5[%c0_12, %c0_13] : memref<128x128xbf16, #tpu.memory_space<vmem>>, vector<128x128xbf16>
    %cst_14 = arith.constant dense<0.000000e+00> : vector<16x128xf32>
    %35 = tpu.matmul %28, %34, %cst_14 {dimension_numbers = #tpu.dot_dimension_numbers<[1], [0], [0], [1], [0, 0, 1, 1], [], []>} : vector<16x128xbf16>, vector<128x128xbf16>, vector<16x128xf32> -> vector<16x128xf32>
    %36 = arith.addf %33, %35 : vector<16x128xf32>
    %c0_15 = arith.constant 0 : index
    %c0_16 = arith.constant 0 : index
    %37 = vector.load %arg6[%c0_15, %c0_16] : memref<16x128xf32, #tpu.memory_space<vmem>>, vector<16x128xf32>
    tpu.vector_store %arg6[%c0_15, %c0_16], %36 {strides = array<i32>} : memref<16x128xf32, #tpu.memory_space<vmem>>, vector<16x128xf32>,
    return
  }
  func.func @transform_0(%arg0: i32) -> (i32, i32) {
    %c0_i32 = arith.constant 0 : i32
    %c0_i32_0 = arith.constant 0 : i32
    return %arg0, %c0_i32 : i32, i32
  }
  func.func @transform_1(%arg0: i32) -> (i32, i32) {
    %c0_i32 = arith.constant 0 : i32
    %c0_i32_0 = arith.constant 0 : i32
    %c0_i32_1 = arith.constant 0 : i32
    return %c0_i32, %c0_i32_0 : i32, i32
  }
  func.func @transform_2(%arg0: i32) -> (i32, i32) {
    %c0_i32 = arith.constant 0 : i32
    %c0_i32_0 = arith.constant 0 : i32
    %c0_i32_1 = arith.constant 0 : i32
    return %c0_i32, %c0_i32_0 : i32, i32
  }
  func.func @transform_3(%arg0: i32) -> (i32, i32) {
    %c0_i32 = arith.constant 0 : i32
    %c0_i32_0 = arith.constant 0 : i32
    %c0_i32_1 = arith.constant 0 : i32
    return %c0_i32, %c0_i32_0 : i32, i32
  }
  func.func @transform_4(%arg0: i32) -> (i32, i32) {
    %c0_i32 = arith.constant 0 : i32
    %c0_i32_0 = arith.constant 0 : i32
    %c0_i32_1 = arith.constant 0 : i32
    return %c0_i32, %c0_i32_0 : i32, i32
  }
  func.func @transform_5(%arg0: i32) -> (i32, i32) {
    %c0_i32 = arith.constant 0 : i32
    %c0_i32_0 = arith.constant 0 : i32
    return %arg0, %c0_i32 : i32, i32
  }
}

</mosaic_0001>

<llo_original>
// kernel: connect_four_forward.1
$region0: #{connect_four_forward.1}
  #allocation0 [shape = 'u32[]', space=smem, size = 0x4, offset = 0x4, fixed_abs, tag = 'smem constant byte address 0x4 - core index']
  #allocation1 [shape = 'u32[144,128]{1,0:T(1,128)}', space=vmem, size = 0x12000, scoped, tag = 'internal scratch']
  %s0 = inlined_call_operand.vmem [shape: bf16[16,128], index: 0, kind: input, shape index: {}]
  %s1 = inlined_call_operand.hbm [shape: bf16[128,1408], index: 1, kind: input, shape index: {}]
  %s2 = inlined_call_operand.hbm [shape: bf16[256,256], index: 2, kind: input, shape index: {}]
  %s3 = inlined_call_operand.hbm [shape: bf16[128,256], index: 3, kind: input, shape index: {}]
  %s4 = inlined_call_operand.vmem [shape: bf16[128,128], index: 4, kind: input, shape index: {}]
  %s5 = inlined_call_operand.vmem [shape: f32[16,128], index: 5, kind: output, shape index: {}]
  %s6 = sld [smem:[#allocation0]]
  $region42: #{connect_four_forward.1} parent=0
    _
  %s8 = ssub.s32 1, %s6
  %s9 = scalar_select 0, %s8, %s6
  $region1: #{connect_four_forward.1} parent=0
    #allocation2 [shape = 'u8[360448]{0}', space=vmem, size = 0x58000, scoped, tag = 'input window, operand 1, single buffered']
    #allocation3 [shape = 's32[1]{0}', space=sflag, size = 0x4, scoped, tag = 'scoped memory for connect_four_forward.1']
    #allocation4 [shape = 'u8[131072]{0}', space=vmem, size = 0x20000, scoped, tag = 'input window, operand 2, single buffered']
    #allocation5 [shape = 's32[1]{0}', space=sflag, size = 0x4, scoped, tag = 'scoped memory for connect_four_forward.1']
    #allocation6 [shape = 'u8[65536]{0}', space=vmem, size = 0x10000, scoped, tag = 'input window, operand 3, single buffered']
    %10 = vsyncpa [#allocation3], 0
    %11 = vsyncpa [#allocation5], 0
    // Predicated region
    $region2: #{connect_four_forward.1} parent=1 // pred_check
      _
    $region3: #{connect_four_forward.1} parent=1 // pred_check_branch
      %13 = sbr.rel (0) target = $region5
    $region4: #{connect_four_forward.1} parent=1 // pred_region
      _
    $region5: #{connect_four_forward.1} parent=1 // pred_fallthru
      _
    // Predicated region
    $region6: #{connect_four_forward.1} parent=1 // pred_check
      _
    $region7: #{connect_four_forward.1} parent=1 // pred_check_branch
      %15 = sbr.rel (0) target = $region9
    $region8: #{connect_four_forward.1} parent=1 // pred_region
      %s17 = ssub.s32 11264, 11264
      %18 = vsyncadd [#allocation3], %s17
      %s19 = sshll.u32 [#allocation2], 4
      %s20 = int_to_ptr.vmem [resolvable:$true] %s19
      %25 = dma.hbm_to_vmem [thread:$0]  %s1, 11264, %s20, [#allocation3], 704, 704, 44
    $region9: #{connect_four_forward.1} parent=1 // pred_fallthru
      _
    // Predicated region
    $region10: #{connect_four_forward.1} parent=1 // pred_check
      _
    $region11: #{connect_four_forward.1} parent=1 // pred_check_branch
      %27 = sbr.rel (0) target = $region13
    $region12: #{connect_four_forward.1} parent=1 // pred_region
      %s29 = ssub.s32 4096, 4096
      %30 = vsyncadd [#allocation5], %s29
      %s31 = sshll.u32 [#allocation4], 4
      %s32 = int_to_ptr.vmem [resolvable:$true] %s31
      %37 = dma.hbm_to_vmem [thread:$0]  %s2, 4096, %s32, [#allocation5], 128, 128, 8
    $region13: #{connect_four_forward.1} parent=1 // pred_fallthru
      _
    // Predicated region
    $region14: #{connect_four_forward.1} parent=1 // pred_check
      _
    $region15: #{connect_four_forward.1} parent=1 // pred_check_branch
      %39 = sbr.rel (0) target = $region17
    $region16: #{connect_four_forward.1} parent=1 // pred_region
      %s41 = ssub.s32 2048, 2048
      %42 = vsyncadd [#allocation5], %s41
      %s43 = sshll.u32 [#allocation6], 4
      %s44 = int_to_ptr.vmem [resolvable:$true] %s43
      %49 = dma.hbm_to_vmem [thread:$0]  %s3, 2048, %s44, [#allocation5], 128, 128, 8
    $region17: #{connect_four_forward.1} parent=1 // pred_fallthru
      _
    // Predicated region
    $region18: #{connect_four_forward.1} parent=1 // pred_check
      _
    $region19: #{connect_four_forward.1} parent=1 // pred_check_branch
      %51 = sbr.rel (0) target = $region21
    $region20: #{connect_four_forward.1} parent=1 // pred_region
      _
    $region21: #{connect_four_forward.1} parent=1 // pred_fallthru
      _
    // Predicated region
    $region22: #{connect_four_forward.1} parent=1 // pred_check
      _
    $region23: #{connect_four_forward.1} parent=1 // pred_check_branch
      %53 = sbr.rel (0) target = $region25
    $region24: #{connect_four_forward.1} parent=1 // pred_region
      %54 = dma.done [#allocation3], 11264
    $region25: #{connect_four_forward.1} parent=1 // pred_fallthru
      _
    // Predicated region
    $region26: #{connect_four_forward.1} parent=1 // pred_check
      _
    $region27: #{connect_four_forward.1} parent=1 // pred_check_branch
      %56 = sbr.rel (0) target = $region29
    $region28: #{connect_four_forward.1} parent=1 // pred_region
      %57 = dma.done [#allocation5], 4096
    $region29: #{connect_four_forward.1} parent=1 // pred_fallthru
      _
    // Predicated region
    $region30: #{connect_four_forward.1} parent=1 // pred_check
      _
    $region31: #{connect_four_forward.1} parent=1 // pred_check_branch
      %59 = sbr.rel (0) target = $region33
    $region32: #{connect_four_forward.1} parent=1 // pred_region
      %60 = dma.done [#allocation5], 2048
    $region33: #{connect_four_forward.1} parent=1 // pred_fallthru
      _
    %v62 = vld [vmem:[%s0] sm:$0xf]
    %v63 = vld [vmem:[%s0 + $0x4] sm:$0xf]
    %v64 = vld [vmem:[#allocation2] sm:$0xff]
    %v65 = vld [vmem:[#allocation2 + $0x8] sm:$0xff]
    %v66 = vld [vmem:[#allocation2 + $0x10] sm:$0xff]
    %v67 = vld [vmem:[#allocation2 + $0x18] sm:$0xff]
    %v68 = vld [vmem:[#allocation2 + $0x20] sm:$0xff]
    %v69 = vld [vmem:[#allocation2 + $0x28] sm:$0xf]
    %v70 = vld [vmem:[#allocation2 + $0x2c] sm:$0xff]
    %v71 = vld [vmem:[#allocation2 + $0x34] sm:$0xff]
    %v72 = vld [vmem:[#allocation2 + $0x3c] sm:$0xff]
    %v73 = vld [vmem:[#allocation2 + $0x44] sm:$0xff]
    %v74 = vld [vmem:[#allocation2 + $0x4c] sm:$0xff]
    %v75 = vld [vmem:[#allocation2 + $0x54] sm:$0xf]
    %v76 = vld [vmem:[#allocation2 + $0x58] sm:$0xff]
    %v77 = vld [vmem:[#allocation2 + $0x60] sm:$0xff]
    %v78 = vld [vmem:[#allocation2 + $0x68] sm:$0xff]
    %v79 = vld [vmem:[#allocation2 + $0x70] sm:$0xff]
    %v80 = vld [vmem:[#allocation2 + $0x78] sm:$0xff]
    %v81 = vld [vmem:[#allocation2 + $0x80] sm:$0xf]
    %v82 = vld [vmem:[#allocation2 + $0x84] sm:$0xff]
    %v83 = vld [vmem:[#allocation2 + $0x8c] sm:$0xff]
    %v84 = vld [vmem:[#allocation2 + $0x94] sm:$0xff]
    %v85 = vld [vmem:[#allocation2 + $0x9c] sm:$0xff]
    %v86 = vld [vmem:[#allocation2 + $0xa4] sm:$0xff]
    %v87 = vld [vmem:[#allocation2 + $0xac] sm:$0xf]
    %v88 = vld [vmem:[#allocation2 + $0xb0] sm:$0xff]
    %v89 = vld [vmem:[#allocation2 + $0xb8] sm:$0xff]
    %v90 = vld [vmem:[#allocation2 + $0xc0] sm:$0xff]
    %v91 = vld [vmem:[#allocation2 + $0xc8] sm:$0xff]
    %v92 = vld [vmem:[#allocation2 + $0xd0] sm:$0xff]
    %v93 = vld [vmem:[#allocation2 + $0xd8] sm:$0xf]
    %v94 = vld [vmem:[#allocation2 + $0xdc] sm:$0xff]
    %v95 = vld [vmem:[#allocation2 + $0xe4] sm:$0xff]
    %v96 = vld [vmem:[#allocation2 + $0xec] sm:$0xff]
    %v97 = vld [vmem:[#allocation2 + $0xf4] sm:$0xff]
    %v98 = vld [vmem:[#allocation2 + $0xfc] sm:$0xff]
    %v99 = vld [vmem:[#allocation2 + $0x104] sm:$0xf]
    %v100 = vld [vmem:[#allocation2 + $0x108] sm:$0xff]
    %v101 = vld [vmem:[#allocation2 + $0x110] sm:$0xff]
    %v102 = vld [vmem:[#allocation2 + $0x118] sm:$0xff]
    %v103 = vld [vmem:[#allocation2 + $0x120] sm:$0xff]
    %v104 = vld [vmem:[#allocation2 + $0x128] sm:$0xff]
    %v105 = vld [vmem:[#allocation2 + $0x130] sm:$0xf]
    %v106 = vld [vmem:[#allocation2 + $0x134] sm:$0xff]
    %v107 = vld [vmem:[#allocation2 + $0x13c] sm:$0xff]
    %v108 = vld [vmem:[#allocation2 + $0x144] sm:$0xff]
    %v109 = vld [vmem:[#allocation2 + $0x14c] sm:$0xff]
    %v110 = vld [vmem:[#allocation2 + $0x154] sm:$0xff]
    %v111 = vld [vmem:[#allocation2 + $0x15c] sm:$0xf]
    %v112 = vld [vmem:[#allocation2 + $0x160] sm:$0xff]
    %v113 = vld [vmem:[#allocation2 + $0x168] sm:$0xff]
    %v114 = vld [vmem:[#allocation2 + $0x170] sm:$0xff]
    %v115 = vld [vmem:[#allocation2 + $0x178] sm:$0xff]
    %v116 = vld [vmem:[#allocation2 + $0x180] sm:$0xff]
    %v117 = vld [vmem:[#allocation2 + $0x188] sm:$0xf]
    %v118 = vld [vmem:[#allocation2 + $0x18c] sm:$0xff]
    %v119 = vld [vmem:[#allocation2 + $0x194] sm:$0xff]
    %v120 = vld [vmem:[#allocation2 + $0x19c] sm:$0xff]
    %v121 = vld [vmem:[#allocation2 + $0x1a4] sm:$0xff]
    %v122 = vld [vmem:[#allocation2 + $0x1ac] sm:$0xff]
    %v123 = vld [vmem:[#allocation2 + $0x1b4] sm:$0xf]
    %v124 = vld [vmem:[#allocation2 + $0x1b8] sm:$0xff]
    %v125 = vld [vmem:[#allocation2 + $0x1c0] sm:$0xff]
    %v126 = vld [vmem:[#allocation2 + $0x1c8] sm:$0xff]
    %v127 = vld [vmem:[#allocation2 + $0x1d0] sm:$0xff]
    %v128 = vld [vmem:[#allocation2 + $0x1d8] sm:$0xff]
    %v129 = vld [vmem:[#allocation2 + $0x1e0] sm:$0xf]
    %v130 = vld [vmem:[#allocation2 + $0x1e4] sm:$0xff]
    %v131 = vld [vmem:[#allocation2 + $0x1ec] sm:$0xff]
    %v132 = vld [vmem:[#allocation2 + $0x1f4] sm:$0xff]
    %v133 = vld [vmem:[#allocation2 + $0x1fc] sm:$0xff]
    %v134 = vld [vmem:[#allocation2 + $0x204] sm:$0xff]
    %v135 = vld [vmem:[#allocation2 + $0x20c] sm:$0xf]
    %v136 = vld [vmem:[#allocation2 + $0x210] sm:$0xff]
    %v137 = vld [vmem:[#allocation2 + $0x218] sm:$0xff]
    %v138 = vld [vmem:[#allocation2 + $0x220] sm:$0xff]
    %v139 = vld [vmem:[#allocation2 + $0x228] sm:$0xff]
    %v140 = vld [vmem:[#allocation2 + $0x230] sm:$0xff]
    %v141 = vld [vmem:[#allocation2 + $0x238] sm:$0xf]
    %v142 = vld [vmem:[#allocation2 + $0x23c] sm:$0xff]
    %v143 = vld [vmem:[#allocation2 + $0x244] sm:$0xff]
    %v144 = vld [vmem:[#allocation2 + $0x24c] sm:$0xff]
    %v145 = vld [vmem:[#allocation2 + $0x254] sm:$0xff]
    %v146 = vld [vmem:[#allocation2 + $0x25c] sm:$0xff]
    %v147 = vld [vmem:[#allocation2 + $0x264] sm:$0xf]
    %v148 = vld [vmem:[#allocation2 + $0x268] sm:$0xff]
    %v149 = vld [vmem:[#allocation2 + $0x270] sm:$0xff]
    %v150 = vld [vmem:[#allocation2 + $0x278] sm:$0xff]
    %v151 = vld [vmem:[#allocation2 + $0x280] sm:$0xff]
    %v152 = vld [vmem:[#allocation2 + $0x288] sm:$0xff]
    %v153 = vld [vmem:[#allocation2 + $0x290] sm:$0xf]
    %v154 = vld [vmem:[#allocation2 + $0x294] sm:$0xff]
    %v155 = vld [vmem:[#allocation2 + $0x29c] sm:$0xff]
    %v156 = vld [vmem:[#allocation2 + $0x2a4] sm:$0xff]
    %v157 = vld [vmem:[#allocation2 + $0x2ac] sm:$0xff]
    %v158 = vld [vmem:[#allocation2 + $0x2b4] sm:$0xff]
    %v159 = vld [vmem:[#allocation2 + $0x2bc] sm:$0xf]
    %v162 = vunpack.c.l.b16 %v62
    %v163 = vunpack.c.l.b16 %v63
    %v164 = vpack.c.b16 %v163, %v162
    %v262 = vunpack.c.l.b16 %v64
    %v263 = vunpack.c.h.b16 %v64
    %v264 = vunpack.c.l.b16 %v65
    %v265 = vunpack.c.h.b16 %v65
    %v266 = vunpack.c.l.b16 %v66
    %v267 = vunpack.c.h.b16 %v66
    %v268 = vunpack.c.l.b16 %v67
    %v269 = vunpack.c.h.b16 %v67
    %v270 = vunpack.c.l.b16 %v68
    %v271 = vunpack.c.h.b16 %v68
    %v272 = vunpack.c.l.b16 %v69
    %v273 = vunpack.c.l.b16 %v70
    %v274 = vunpack.c.h.b16 %v70
    %v275 = vunpack.c.l.b16 %v71
    %v276 = vunpack.c.h.b16 %v71
    %v277 = vunpack.c.l.b16 %v72
    %v278 = vunpack.c.h.b16 %v72
    %v279 = vunpack.c.l.b16 %v73
    %v280 = vunpack.c.h.b16 %v73
    %v281 = vunpack.c.l.b16 %v74
    %v282 = vunpack.c.h.b16 %v74
    %v283 = vunpack.c.l.b16 %v75
    %v284 = vunpack.c.l.b16 %v76
    %v285 = vunpack.c.h.b16 %v76
    %v286 = vunpack.c.l.b16 %v77
    %v287 = vunpack.c.h.b16 %v77
    %v288 = vunpack.c.l.b16 %v78
    %v289 = vunpack.c.h.b16 %v78
    %v290 = vunpack.c.l.b16 %v79
    %v291 = vunpack.c.h.b16 %v79
    %v292 = vunpack.c.l.b16 %v80
    %v293 = vunpack.c.h.b16 %v80
    %v294 = vunpack.c.l.b16 %v81
    %v295 = vunpack.c.l.b16 %v82
    %v296 = vunpack.c.h.b16 %v82
    %v297 = vunpack.c.l.b16 %v83
    %v298 = vunpack.c.h.b16 %v83
    %v299 = vunpack.c.l.b16 %v84
    %v300 = vunpack.c.h.b16 %v84
    %v301 = vunpack.c.l.b16 %v85
    %v302 = vunpack.c.h.b16 %v85
    %v303 = vunpack.c.l.b16 %v86
    %v304 = vunpack.c.h.b16 %v86
    %v305 = vunpack.c.l.b16 %v87
    %v306 = vunpack.c.l.b16 %v88
    %v307 = vunpack.c.h.b16 %v88
    %v308 = vunpack.c.l.b16 %v89
    %v309 = vunpack.c.h.b16 %v89
    %v310 = vunpack.c.l.b16 %v90
    %v311 = vunpack.c.h.b16 %v90
    %v312 = vunpack.c.l.b16 %v91
    %v313 = vunpack.c.h.b16 %v91
    %v314 = vunpack.c.l.b16 %v92
    %v315 = vunpack.c.h.b16 %v92
    %v316 = vunpack.c.l.b16 %v93
    %v317 = vunpack.c.l.b16 %v94
    %v318 = vunpack.c.h.b16 %v94
    %v319 = vunpack.c.l.b16 %v95
    %v320 = vunpack.c.h.b16 %v95
    %v321 = vunpack.c.l.b16 %v96
    %v322 = vunpack.c.h.b16 %v96
    %v323 = vunpack.c.l.b16 %v97
    %v324 = vunpack.c.h.b16 %v97
    %v325 = vunpack.c.l.b16 %v98
    %v326 = vunpack.c.h.b16 %v98
    %v327 = vunpack.c.l.b16 %v99
    %v328 = vunpack.c.l.b16 %v100
    %v329 = vunpack.c.h.b16 %v100
    %v330 = vunpack.c.l.b16 %v101
    %v331 = vunpack.c.h.b16 %v101
    %v332 = vunpack.c.l.b16 %v102
    %v333 = vunpack.c.h.b16 %v102
    %v334 = vunpack.c.l.b16 %v103
    %v335 = vunpack.c.h.b16 %v103
    %v336 = vunpack.c.l.b16 %v104
    %v337 = vunpack.c.h.b16 %v104
    %v338 = vunpack.c.l.b16 %v105
    %v339 = vunpack.c.l.b16 %v106
    %v340 = vunpack.c.h.b16 %v106
    %v341 = vunpack.c.l.b16 %v107
    %v342 = vunpack.c.h.b16 %v107
    %v343 = vunpack.c.l.b16 %v108
    %v344 = vunpack.c.h.b16 %v108
    %v345 = vunpack.c.l.b16 %v109
    %v346 = vunpack.c.h.b16 %v109
    %v347 = vunpack.c.l.b16 %v110
    %v348 = vunpack.c.h.b16 %v110
    %v349 = vunpack.c.l.b16 %v111
    %v350 = vunpack.c.l.b16 %v112
    %v351 = vunpack.c.h.b16 %v112
    %v352 = vunpack.c.l.b16 %v113
    %v353 = vunpack.c.h.b16 %v113
    %v354 = vunpack.c.l.b16 %v114
    %v355 = vunpack.c.h.b16 %v114
    %v356 = vunpack.c.l.b16 %v115
    %v357 = vunpack.c.h.b16 %v115
    %v358 = vunpack.c.l.b16 %v116
    %v359 = vunpack.c.h.b16 %v116
    %v360 = vunpack.c.l.b16 %v117
    %v361 = vunpack.c.l.b16 %v118
    %v362 = vunpack.c.h.b16 %v118
    %v363 = vunpack.c.l.b16 %v119
    %v364 = vunpack.c.h.b16 %v119
    %v365 = vunpack.c.l.b16 %v120
    %v366 = vunpack.c.h.b16 %v120
    %v367 = vunpack.c.l.b16 %v121
    %v368 = vunpack.c.h.b16 %v121
    %v369 = vunpack.c.l.b16 %v122
    %v370 = vunpack.c.h.b16 %v122
    %v371 = vunpack.c.l.b16 %v123
    %v372 = vunpack.c.l.b16 %v124
    %v373 = vunpack.c.h.b16 %v124
    %v374 = vunpack.c.l.b16 %v125
    %v375 = vunpack.c.h.b16 %v125
    %v376 = vunpack.c.l.b16 %v126
    %v377 = vunpack.c.h.b16 %v126
    %v378 = vunpack.c.l.b16 %v127
    %v379 = vunpack.c.h.b16 %v127
    %v380 = vunpack.c.l.b16 %v128
    %v381 = vunpack.c.h.b16 %v128
    %v382 = vunpack.c.l.b16 %v129
    %v383 = vunpack.c.l.b16 %v130
    %v384 = vunpack.c.h.b16 %v130
    %v385 = vunpack.c.l.b16 %v131
    %v386 = vunpack.c.h.b16 %v131
    %v387 = vunpack.c.l.b16 %v132
    %v388 = vunpack.c.h.b16 %v132
    %v389 = vunpack.c.l.b16 %v133
    %v390 = vunpack.c.h.b16 %v133
    %v391 = vunpack.c.l.b16 %v134
    %v392 = vunpack.c.h.b16 %v134
    %v393 = vunpack.c.l.b16 %v135
    %v394 = vunpack.c.l.b16 %v136
    %v395 = vunpack.c.h.b16 %v136
    %v396 = vunpack.c.l.b16 %v137
    %v397 = vunpack.c.h.b16 %v137
    %v398 = vunpack.c.l.b16 %v138
    %v399 = vunpack.c.h.b16 %v138
    %v400 = vunpack.c.l.b16 %v139
    %v401 = vunpack.c.h.b16 %v139
    %v402 = vunpack.c.l.b16 %v140
    %v403 = vunpack.c.h.b16 %v140
    %v404 = vunpack.c.l.b16 %v141
    %v405 = vunpack.c.l.b16 %v142
    %v406 = vunpack.c.h.b16 %v142
    %v407 = vunpack.c.l.b16 %v143
    %v408 = vunpack.c.h.b16 %v143
    %v409 = vunpack.c.l.b16 %v144
    %v410 = vunpack.c.h.b16 %v144
    %v411 = vunpack.c.l.b16 %v145
    %v412 = vunpack.c.h.b16 %v145
    %v413 = vunpack.c.l.b16 %v146
    %v414 = vunpack.c.h.b16 %v146
    %v415 = vunpack.c.l.b16 %v147
    %v416 = vunpack.c.l.b16 %v148
    %v417 = vunpack.c.h.b16 %v148
    %v418 = vunpack.c.l.b16 %v149
    %v419 = vunpack.c.h.b16 %v149
    %v420 = vunpack.c.l.b16 %v150
    %v421 = vunpack.c.h.b16 %v150
    %v422 = vunpack.c.l.b16 %v151
    %v423 = vunpack.c.h.b16 %v151
    %v424 = vunpack.c.l.b16 %v152
    %v425 = vunpack.c.h.b16 %v152
    %v426 = vunpack.c.l.b16 %v153
    %v427 = vunpack.c.l.b16 %v154
    %v428 = vunpack.c.h.b16 %v154
    %v429 = vunpack.c.l.b16 %v155
    %v430 = vunpack.c.h.b16 %v155
    %v431 = vunpack.c.l.b16 %v156
    %v432 = vunpack.c.h.b16 %v156
    %v433 = vunpack.c.l.b16 %v157
    %v434 = vunpack.c.h.b16 %v157
    %v435 = vunpack.c.l.b16 %v158
    %v436 = vunpack.c.h.b16 %v158
    %v437 = vunpack.c.l.b16 %v159
    %v438 = vpack.c.b16 %v273, %v262
    %v439 = vpack.c.b16 %v274, %v263
    %v440 = vpack.c.b16 %v275, %v264
    %v441 = vpack.c.b16 %v276, %v265
    %v442 = vpack.c.b16 %v277, %v266
    %v443 = vpack.c.b16 %v278, %v267
    %v444 = vpack.c.b16 %v279, %v268
    %v445 = vpack.c.b16 %v280, %v269
    %v446 = vpack.c.b16 %v281, %v270
    %v447 = vpack.c.b16 %v282, %v271
    %v448 = vpack.c.b16 %v283, %v272
    %v449 = vpack.c.b16 %v295, %v284
    %v450 = vpack.c.b16 %v296, %v285
    %v451 = vpack.c.b16 %v297, %v286
    %v452 = vpack.c.b16 %v298, %v287
    %v453 = vpack.c.b16 %v299, %v288
    %v454 = vpack.c.b16 %v300, %v289
    %v455 = vpack.c.b16 %v301, %v290
    %v456 = vpack.c.b16 %v302, %v291
    %v457 = vpack.c.b16 %v303, %v292
    %v458 = vpack.c.b16 %v304, %v293
    %v459 = vpack.c.b16 %v305, %v294
    %v460 = vpack.c.b16 %v317, %v306
    %v461 = vpack.c.b16 %v318, %v307
    %v462 = vpack.c.b16 %v319, %v308
    %v463 = vpack.c.b16 %v320, %v309
    %v464 = vpack.c.b16 %v321, %v310
    %v465 = vpack.c.b16 %v322, %v311
    %v466 = vpack.c.b16 %v323, %v312
    %v467 = vpack.c.b16 %v324, %v313
    %v468 = vpack.c.b16 %v325, %v314
    %v469 = vpack.c.b16 %v326, %v315
    %v470 = vpack.c.b16 %v327, %v316
    %v471 = vpack.c.b16 %v339, %v328
    %v472 = vpack.c.b16 %v340, %v329
    %v473 = vpack.c.b16 %v341, %v330
    %v474 = vpack.c.b16 %v342, %v331
    %v475 = vpack.c.b16 %v343, %v332
    %v476 = vpack.c.b16 %v344, %v333
    %v477 = vpack.c.b16 %v345, %v334
    %v478 = vpack.c.b16 %v346, %v335
    %v479 = vpack.c.b16 %v347, %v336
    %v480 = vpack.c.b16 %v348, %v337
    %v481 = vpack.c.b16 %v349, %v338
    %v482 = vpack.c.b16 %v361, %v350
    %v483 = vpack.c.b16 %v362, %v351
    %v484 = vpack.c.b16 %v363, %v352
    %v485 = vpack.c.b16 %v364, %v353
    %v486 = vpack.c.b16 %v365, %v354
    %v487 = vpack.c.b16 %v366, %v355
    %v488 = vpack.c.b16 %v367, %v356
    %v489 = vpack.c.b16 %v368, %v357
    %v490 = vpack.c.b16 %v369, %v358
    %v491 = vpack.c.b16 %v370, %v359
    %v492 = vpack.c.b16 %v371, %v360
    %v493 = vpack.c.b16 %v383, %v372
    %v494 = vpack.c.b16 %v384, %v373
    %v495 = vpack.c.b16 %v385, %v374
    %v496 = vpack.c.b16 %v386, %v375
    %v497 = vpack.c.b16 %v387, %v376
    %v498 = vpack.c.b16 %v388, %v377
    %v499 = vpack.c.b16 %v389, %v378
    %v500 = vpack.c.b16 %v390, %v379
    %v501 = vpack.c.b16 %v391, %v380
    %v502 = vpack.c.b16 %v392, %v381
    %v503 = vpack.c.b16 %v393, %v382
    %v504 = vpack.c.b16 %v405, %v394
    %v505 = vpack.c.b16 %v406, %v395
    %v506 = vpack.c.b16 %v407, %v396
    %v507 = vpack.c.b16 %v408, %v397
    %v508 = vpack.c.b16 %v409, %v398
    %v509 = vpack.c.b16 %v410, %v399
    %v510 = vpack.c.b16 %v411, %v400
    %v511 = vpack.c.b16 %v412, %v401
    %v512 = vpack.c.b16 %v413, %v402
    %v513 = vpack.c.b16 %v414, %v403
    %v514 = vpack.c.b16 %v415, %v404
    %v515 = vpack.c.b16 %v427, %v416
    %v516 = vpack.c.b16 %v428, %v417
    %v517 = vpack.c.b16 %v429, %v418
    %v518 = vpack.c.b16 %v430, %v419
    %v519 = vpack.c.b16 %v431, %v420
    %v520 = vpack.c.b16 %v432, %v421
    %v521 = vpack.c.b16 %v433, %v422
    %v522 = vpack.c.b16 %v434, %v423
    %v523 = vpack.c.b16 %v435, %v424
    %v524 = vpack.c.b16 %v436, %v425
    %v525 = vpack.c.b16 %v437, %v426
    %614 = vmatprep.subr.bf16.mxu0 %v439
    %615 = vmatpush1.bf16.msra.mxu0 %v438
    %616 = vmatprep.subr.bf16.mxu0 %v450
    %617 = vmatpush1.bf16.msra.mxu0 %v449
    %618 = vmatprep.subr.bf16.mxu0 %v461
    %619 = vmatpush1.bf16.msra.mxu0 %v460
    %620 = vmatprep.subr.bf16.mxu0 %v472
    %621 = vmatpush1.bf16.msra.mxu0 %v471
    %622 = vmatprep.subr.bf16.mxu0 %v483
    %623 = vmatpush1.bf16.msra.mxu0 %v482
    %624 = vmatprep.subr.bf16.mxu0 %v494
    %625 = vmatpush1.bf16.msra.mxu0 %v493
    %626 = vmatprep.subr.bf16.mxu0 %v505
    %627 = vmatpush1.bf16.msra.mxu0 %v504
    %628 = vmatprep.subr.bf16.mxu0 %v516
    %629 = vmatpush1.bf16.msra.mxu0 %v515
    %630 = vmatprep.subr.bf16.mxu0 0
    %631 = vmatpush1.bf16.msra.mxu0 0
    %632 = vmatprep.subr.bf16.mxu0 0
    %633 = vmatpush1.bf16.msra.mxu0 0
    %634 = vmatprep.subr.bf16.mxu0 0
    %635 = vmatpush1.bf16.msra.mxu0 0
    %636 = vmatprep.subr.bf16.mxu0 0
    %637 = vmatpush1.bf16.msra.mxu0 0
    %638 = vmatprep.subr.bf16.mxu0 0
    %639 = vmatpush1.bf16.msra.mxu0 0
    %640 = vmatprep.subr.bf16.mxu0 0
    %641 = vmatpush1.bf16.msra.mxu0 0
    %642 = vmatprep.subr.bf16.mxu0 0
    %643 = vmatpush1.bf16.msra.mxu0 0
    %644 = vmatprep.subr.bf16.mxu0 0
    %645 = vmatpush1.bf16.msra.mxu0 0
    %646 = vmatprep.mubr.bf16.mxu0 0
    %647 = vmatmul.mubr.bf16.gmra.mrb[0].mxu0 %v164
    %v648 = vpop.f32.mrb[0].mxu0
    %v649 = vadd.f32 0.0, %v648
    %v650 = vpop.f32.mrb[0].mxu0
    %v651 = vadd.f32 0.0, %v650
    %v652 = vpop.f32.mrb[0].mxu0
    %v653 = vadd.f32 0.0, %v652
    %v654 = vpop.f32.mrb[0].mxu0
    %v655 = vadd.f32 0.0, %v654
    %656 = vdwg.mxu0
    %657 = vmatprep.subr.bf16.mxu0 %v441
    %658 = vmatpush1.bf16.msra.mxu0 %v440
    %659 = vmatprep.subr.bf16.mxu0 %v452
    %660 = vmatpush1.bf16.msra.mxu0 %v451
    %661 = vmatprep.subr.bf16.mxu0 %v463
    %662 = vmatpush1.bf16.msra.mxu0 %v462
    %663 = vmatprep.subr.bf16.mxu0 %v474
    %664 = vmatpush1.bf16.msra.mxu0 %v473
    %665 = vmatprep.subr.bf16.mxu0 %v485
    %666 = vmatpush1.bf16.msra.mxu0 %v484
    %667 = vmatprep.subr.bf16.mxu0 %v496
    %668 = vmatpush1.bf16.msra.mxu0 %v495
    %669 = vmatprep.subr.bf16.mxu0 %v507
    %670 = vmatpush1.bf16.msra.mxu0 %v506
    %671 = vmatprep.subr.bf16.mxu0 %v518
    %672 = vmatpush1.bf16.msra.mxu0 %v517
    %673 = vmatprep.subr.bf16.mxu0 0
    %674 = vmatpush1.bf16.msra.mxu0 0
    %675 = vmatprep.subr.bf16.mxu0 0
    %676 = vmatpush1.bf16.msra.mxu0 0
    %677 = vmatprep.subr.bf16.mxu0 0
    %678 = vmatpush1.bf16.msra.mxu0 0
    %679 = vmatprep.subr.bf16.mxu0 0
    %680 = vmatpush1.bf16.msra.mxu0 0
    %681 = vmatprep.subr.bf16.mxu0 0
    %682 = vmatpush1.bf16.msra.mxu0 0
    %683 = vmatprep.subr.bf16.mxu0 0
    %684 = vmatpush1.bf16.msra.mxu0 0
    %685 = vmatprep.subr.bf16.mxu0 0
    %686 = vmatpush1.bf16.msra.mxu0 0
    %687 = vmatprep.subr.bf16.mxu0 0
    %688 = vmatpush1.bf16.msra.mxu0 0
    %689 = vmatprep.mubr.bf16.mxu0 0
    %690 = vmatmul.mubr.bf16.gmra.mrb[0].mxu0 %v164
    %v691 = vpop.f32.mrb[0].mxu0
    %v692 = vadd.f32 0.0, %v691
    %v693 = vpop.f32.mrb[0].mxu0
    %v694 = vadd.f32 0.0, %v693
    %v695 = vpop.f32.mrb[0].mxu0
    %v696 = vadd.f32 0.0, %v695
    %v697 = vpop.f32.mrb[0].mxu0
    %v698 = vadd.f32 0.0, %v697
    %699 = vdwg.mxu0
    %700 = vmatprep.subr.bf16.mxu0 %v443
    %701 = vmatpush1.bf16.msra.mxu0 %v442
    %702 = vmatprep.subr.bf16.mxu0 %v454
    %703 = vmatpush1.bf16.msra.mxu0 %v453
    %704 = vmatprep.subr.bf16.mxu0 %v465
    %705 = vmatpush1.bf16.msra.mxu0 %v464
    %706 = vmatprep.subr.bf16.mxu0 %v476
    %707 = vmatpush1.bf16.msra.mxu0 %v475
    %708 = vmatprep.subr.bf16.mxu0 %v487
    %709 = vmatpush1.bf16.msra.mxu0 %v486
    %710 = vmatprep.subr.bf16.mxu0 %v498
    %711 = vmatpush1.bf16.msra.mxu0 %v497
    %712 = vmatprep.subr.bf16.mxu0 %v509
    %713 = vmatpush1.bf16.msra.mxu0 %v508
    %714 = vmatprep.subr.bf16.mxu0 %v520
    %715 = vmatpush1.bf16.msra.mxu0 %v519
    %716 = vmatprep.subr.bf16.mxu0 0
    %717 = vmatpush1.bf16.msra.mxu0 0
    %718 = vmatprep.subr.bf16.mxu0 0
    %719 = vmatpush1.bf16.msra.mxu0 0
    %720 = vmatprep.subr.bf16.mxu0 0
    %721 = vmatpush1.bf16.msra.mxu0 0
    %722 = vmatprep.subr.bf16.mxu0 0
    %723 = vmatpush1.bf16.msra.mxu0 0
    %724 = vmatprep.subr.bf16.mxu0 0
    %725 = vmatpush1.bf16.msra.mxu0 0
    %726 = vmatprep.subr.bf16.mxu0 0
    %727 = vmatpush1.bf16.msra.mxu0 0
    %728 = vmatprep.subr.bf16.mxu0 0
    %729 = vmatpush1.bf16.msra.mxu0 0
    %730 = vmatprep.subr.bf16.mxu0 0
    %731 = vmatpush1.bf16.msra.mxu0 0
    %732 = vmatprep.mubr.bf16.mxu0 0
    %733 = vmatmul.mubr.bf16.gmra.mrb[0].mxu0 %v164
    %v734 = vpop.f32.mrb[0].mxu0
    %v735 = vadd.f32 0.0, %v734
    %v736 = vpop.f32.mrb[0].mxu0
    %v737 = vadd.f32 0.0, %v736
    %v738 = vpop.f32.mrb[0].mxu0
    %v739 = vadd.f32 0.0, %v738
    %v740 = vpop.f32.mrb[0].mxu0
    %v741 = vadd.f32 0.0, %v740
    %742 = vdwg.mxu0
    %743 = vmatprep.subr.bf16.mxu0 %v445
    %744 = vmatpush1.bf16.msra.mxu0 %v444
    %745 = vmatprep.subr.bf16.mxu0 %v456
    %746 = vmatpush1.bf16.msra.mxu0 %v455
    %747 = vmatprep.subr.bf16.mxu0 %v467
    %748 = vmatpush1.bf16.msra.mxu0 %v466
    %749 = vmatprep.subr.bf16.mxu0 %v478
    %750 = vmatpush1.bf16.msra.mxu0 %v477
    %751 = vmatprep.subr.bf16.mxu0 %v489
    %752 = vmatpush1.bf16.msra.mxu0 %v488
    %753 = vmatprep.subr.bf16.mxu0 %v500
    %754 = vmatpush1.bf16.msra.mxu0 %v499
    %755 = vmatprep.subr.bf16.mxu0 %v511
    %756 = vmatpush1.bf16.msra.mxu0 %v510
    %757 = vmatprep.subr.bf16.mxu0 %v522
    %758 = vmatpush1.bf16.msra.mxu0 %v521
    %759 = vmatprep.subr.bf16.mxu0 0
    %760 = vmatpush1.bf16.msra.mxu0 0
    %761 = vmatprep.subr.bf16.mxu0 0
    %762 = vmatpush1.bf16.msra.mxu0 0
    %763 = vmatprep.subr.bf16.mxu0 0
    %764 = vmatpush1.bf16.msra.mxu0 0
    %765 = vmatprep.subr.bf16.mxu0 0
    %766 = vmatpush1.bf16.msra.mxu0 0
    %767 = vmatprep.subr.bf16.mxu0 0
    %768 = vmatpush1.bf16.msra.mxu0 0
    %769 = vmatprep.subr.bf16.mxu0 0
    %770 = vmatpush1.bf16.msra.mxu0 0
    %771 = vmatprep.subr.bf16.mxu0 0
    %772 = vmatpush1.bf16.msra.mxu0 0
    %773 = vmatprep.subr.bf16.mxu0 0
    %774 = vmatpush1.bf16.msra.mxu0 0
    %775 = vmatprep.mubr.bf16.mxu0 0
    %776 = vmatmul.mubr.bf16.gmra.mrb[0].mxu0 %v164
    %v777 = vpop.f32.mrb[0].mxu0
    %v778 = vadd.f32 0.0, %v777
    %v779 = vpop.f32.mrb[0].mxu0
    %v780 = vadd.f32 0.0, %v779
    %v781 = vpop.f32.mrb[0].mxu0
    %v782 = vadd.f32 0.0, %v781
    %v783 = vpop.f32.mrb[0].mxu0
    %v784 = vadd.f32 0.0, %v783
    %785 = vdwg.mxu0
    %786 = vmatprep.subr.bf16.mxu0 %v447
    %787 = vmatpush1.bf16.msra.mxu0 %v446
    %788 = vmatprep.subr.bf16.mxu0 %v458
    %789 = vmatpush1.bf16.msra.mxu0 %v457
    %790 = vmatprep.subr.bf16.mxu0 %v469
    %791 = vmatpush1.bf16.msra.mxu0 %v468
    %792 = vmatprep.subr.bf16.mxu0 %v480
    %793 = vmatpush1.bf16.msra.mxu0 %v479
    %794 = vmatprep.subr.bf16.mxu0 %v491
    %795 = vmatpush1.bf16.msra.mxu0 %v490
    %796 = vmatprep.subr.bf16.mxu0 %v502
    %797 = vmatpush1.bf16.msra.mxu0 %v501
    %798 = vmatprep.subr.bf16.mxu0 %v513
    %799 = vmatpush1.bf16.msra.mxu0 %v512
    %800 = vmatprep.subr.bf16.mxu0 %v524
    %801 = vmatpush1.bf16.msra.mxu0 %v523
    %802 = vmatprep.subr.bf16.mxu0 0
    %803 = vmatpush1.bf16.msra.mxu0 0
    %804 = vmatprep.subr.bf16.mxu0 0
    %805 = vmatpush1.bf16.msra.mxu0 0
    %806 = vmatprep.subr.bf16.mxu0 0
    %807 = vmatpush1.bf16.msra.mxu0 0
    %808 = vmatprep.subr.bf16.mxu0 0
    %809 = vmatpush1.bf16.msra.mxu0 0
    %810 = vmatprep.subr.bf16.mxu0 0
    %811 = vmatpush1.bf16.msra.mxu0 0
    %812 = vmatprep.subr.bf16.mxu0 0
    %813 = vmatpush1.bf16.msra.mxu0 0
    %814 = vmatprep.subr.bf16.mxu0 0
    %815 = vmatpush1.bf16.msra.mxu0 0
    %816 = vmatprep.subr.bf16.mxu0 0
    %817 = vmatpush1.bf16.msra.mxu0 0
    %818 = vmatprep.mubr.bf16.mxu0 0
    %819 = vmatmul.mubr.bf16.gmra.mrb[0].mxu0 %v164
    %v820 = vpop.f32.mrb[0].mxu0
    %v821 = vadd.f32 0.0, %v820
    %v822 = vpop.f32.mrb[0].mxu0
    %v823 = vadd.f32 0.0, %v822
    %v824 = vpop.f32.mrb[0].mxu0
    %v825 = vadd.f32 0.0, %v824
    %v826 = vpop.f32.mrb[0].mxu0
    %v827 = vadd.f32 0.0, %v826
    %828 = vdwg.mxu0
    %829 = vmatprep.subr.bf16.mxu0 0
    %830 = vmatpush1.bf16.msra.mxu0 %v448
    %831 = vmatprep.subr.bf16.mxu0 0
    %832 = vmatpush1.bf16.msra.mxu0 %v459
    %833 = vmatprep.subr.bf16.mxu0 0
    %834 = vmatpush1.bf16.msra.mxu0 %v470
    %835 = vmatprep.subr.bf16.mxu0 0
    %836 = vmatpush1.bf16.msra.mxu0 %v481
    %837 = vmatprep.subr.bf16.mxu0 0
    %838 = vmatpush1.bf16.msra.mxu0 %v492
    %839 = vmatprep.subr.bf16.mxu0 0
    %840 = vmatpush1.bf16.msra.mxu0 %v503
    %841 = vmatprep.subr.bf16.mxu0 0
    %842 = vmatpush1.bf16.msra.mxu0 %v514
    %843 = vmatprep.subr.bf16.mxu0 0
    %844 = vmatpush1.bf16.msra.mxu0 %v525
    %845 = vmatprep.subr.bf16.mxu0 0
    %846 = vmatpush1.bf16.msra.mxu0 0
    %847 = vmatprep.subr.bf16.mxu0 0
    %848 = vmatpush1.bf16.msra.mxu0 0
    %849 = vmatprep.subr.bf16.mxu0 0
    %850 = vmatpush1.bf16.msra.mxu0 0
    %851 = vmatprep.subr.bf16.mxu0 0
    %852 = vmatpush1.bf16.msra.mxu0 0
    %853 = vmatprep.subr.bf16.mxu0 0
    %854 = vmatpush1.bf16.msra.mxu0 0
    %855 = vmatprep.subr.bf16.mxu0 0
    %856 = vmatpush1.bf16.msra.mxu0 0
    %857 = vmatprep.subr.bf16.mxu0 0
    %858 = vmatpush1.bf16.msra.mxu0 0
    %859 = vmatprep.subr.bf16.mxu0 0
    %860 = vmatpush1.bf16.msra.mxu0 0
    %861 = vmatprep.mubr.bf16.mxu0 0
    %862 = vmatmul.mubr.bf16.gmra.mrb[0].mxu0 %v164
    %v863 = vpop.f32.mrb[0].mxu0
    %v864 = vadd.f32 0.0, %v863
    %v865 = vpop.f32.mrb[0].mxu0
    %v866 = vpop.f32.mrb[0].mxu0
    %v867 = vadd.f32 0.0, %v866
    %v868 = vpop.f32.mrb[0].mxu0
    %869 = vdwg.mxu0
    %v870 = vmax.f32 %v649, %v692
    %v871 = vmax.f32 %v651, %v694
    %v872 = vmax.f32 %v653, %v696
    %v873 = vmax.f32 %v655, %v698
    %v874 = vmax.f32 %v735, %v778
    %v875 = vmax.f32 %v737, %v780
    %v876 = vmax.f32 %v739, %v782
    %v877 = vmax.f32 %v741, %v784
    %v878 = vmax.f32 %v870, %v874
    %v879 = vmax.f32 %v871, %v875
    %v880 = vmax.f32 %v872, %v876
    %v881 = vmax.f32 %v873, %v877
    %v882 = vmax.f32 %v878, 0.0
    %v883 = vmax.f32 %v879, 0.0
    %v884 = vmax.f32 %v880, 0.0
    %v885 = vmax.f32 %v881, 0.0
    %v886 = vpack.c.bf16 %v884, %v882
    %v887 = vpack.c.bf16 %v885, %v883
    %v888 = vld [vmem:[#allocation4] sm:$0xff]
    %v889 = vld [vmem:[#allocation4 + $0x8] sm:$0xff]
    %v890 = vld [vmem:[#allocation4 + $0x10] sm:$0xff]
    %v891 = vld [vmem:[#allocation4 + $0x18] sm:$0xff]
    %v892 = vld [vmem:[#allocation4 + $0x20] sm:$0xff]
    %v893 = vld [vmem:[#allocation4 + $0x28] sm:$0xff]
    %v894 = vld [vmem:[#allocation4 + $0x30] sm:$0xff]
    %v895 = vld [vmem:[#allocation4 + $0x38] sm:$0xff]
    %v896 = vld [vmem:[#allocation4 + $0x40] sm:$0xff]
    %v897 = vld [vmem:[#allocation4 + $0x48] sm:$0xff]
    %v898 = vld [vmem:[#allocation4 + $0x50] sm:$0xff]
    %v899 = vld [vmem:[#allocation4 + $0x58] sm:$0xff]
    %v900 = vld [vmem:[#allocation4 + $0x60] sm:$0xff]
    %v901 = vld [vmem:[#allocation4 + $0x68] sm:$0xff]
    %v902 = vld [vmem:[#allocation4 + $0x70] sm:$0xff]
    %v903 = vld [vmem:[#allocation4 + $0x78] sm:$0xff]
    %v904 = vld [vmem:[#allocation4 + $0x80] sm:$0xff]
    %v905 = vld [vmem:[#allocation4 + $0x88] sm:$0xff]
    %v906 = vld [vmem:[#allocation4 + $0x90] sm:$0xff]
    %v907 = vld [vmem:[#allocation4 + $0x98] sm:$0xff]
    %v908 = vld [vmem:[#allocation4 + $0xa0] sm:$0xff]
    %v909 = vld [vmem:[#allocation4 + $0xa8] sm:$0xff]
    %v910 = vld [vmem:[#allocation4 + $0xb0] sm:$0xff]
    %v911 = vld [vmem:[#allocation4 + $0xb8] sm:$0xff]
    %v912 = vld [vmem:[#allocation4 + $0xc0] sm:$0xff]
    %v913 = vld [vmem:[#allocation4 + $0xc8] sm:$0xff]
    %v914 = vld [vmem:[#allocation4 + $0xd0] sm:$0xff]
    %v915 = vld [vmem:[#allocation4 + $0xd8] sm:$0xff]
    %v916 = vld [vmem:[#allocation4 + $0xe0] sm:$0xff]
    %v917 = vld [vmem:[#allocation4 + $0xe8] sm:$0xff]
    %v918 = vld [vmem:[#allocation4 + $0xf0] sm:$0xff]
    %v919 = vld [vmem:[#allocation4 + $0xf8] sm:$0xff]
    %v952 = vunpack.c.l.b16 %v888
    %v953 = vunpack.c.h.b16 %v888
    %v954 = vunpack.c.l.b16 %v889
    %v955 = vunpack.c.h.b16 %v889
    %v956 = vunpack.c.l.b16 %v890
    %v957 = vunpack.c.h.b16 %v890
    %v958 = vunpack.c.l.b16 %v891
    %v959 = vunpack.c.h.b16 %v891
    %v960 = vunpack.c.l.b16 %v892
    %v961 = vunpack.c.h.b16 %v892
    %v962 = vunpack.c.l.b16 %v893
    %v963 = vunpack.c.h.b16 %v893
    %v964 = vunpack.c.l.b16 %v894
    %v965 = vunpack.c.h.b16 %v894
    %v966 = vunpack.c.l.b16 %v895
    %v967 = vunpack.c.h.b16 %v895
    %v968 = vunpack.c.l.b16 %v896
    %v969 = vunpack.c.h.b16 %v896
    %v970 = vunpack.c.l.b16 %v897
    %v971 = vunpack.c.h.b16 %v897
    %v972 = vunpack.c.l.b16 %v898
    %v973 = vunpack.c.h.b16 %v898
    %v974 = vunpack.c.l.b16 %v899
    %v975 = vunpack.c.h.b16 %v899
    %v976 = vunpack.c.l.b16 %v900
    %v977 = vunpack.c.h.b16 %v900
    %v978 = vunpack.c.l.b16 %v901
    %v979 = vunpack.c.h.b16 %v901
    %v980 = vunpack.c.l.b16 %v902
    %v981 = vunpack.c.h.b16 %v902
    %v982 = vunpack.c.l.b16 %v903
    %v983 = vunpack.c.h.b16 %v903
    %v984 = vunpack.c.l.b16 %v904
    %v985 = vunpack.c.h.b16 %v904
    %v986 = vunpack.c.l.b16 %v905
    %v987 = vunpack.c.h.b16 %v905
    %v988 = vunpack.c.l.b16 %v906
    %v989 = vunpack.c.h.b16 %v906
    %v990 = vunpack.c.l.b16 %v907
    %v991 = vunpack.c.h.b16 %v907
    %v992 = vunpack.c.l.b16 %v908
    %v993 = vunpack.c.h.b16 %v908
    %v994 = vunpack.c.l.b16 %v909
    %v995 = vunpack.c.h.b16 %v909
    %v996 = vunpack.c.l.b16 %v910
    %v997 = vunpack.c.h.b16 %v910
    %v998 = vunpack.c.l.b16 %v911
    %v999 = vunpack.c.h.b16 %v911
    %v1000 = vunpack.c.l.b16 %v912
    %v1001 = vunpack.c.h.b16 %v912
    %v1002 = vunpack.c.l.b16 %v913
    %v1003 = vunpack.c.h.b16 %v913
    %v1004 = vunpack.c.l.b16 %v914
    %v1005 = vunpack.c.h.b16 %v914
    %v1006 = vunpack.c.l.b16 %v915
    %v1007 = vunpack.c.h.b16 %v915
    %v1008 = vunpack.c.l.b16 %v916
    %v1009 = vunpack.c.h.b16 %v916
    %v1010 = vunpack.c.l.b16 %v917
    %v1011 = vunpack.c.h.b16 %v917
    %v1012 = vunpack.c.l.b16 %v918
    %v1013 = vunpack.c.h.b16 %v918
    %v1014 = vunpack.c.l.b16 %v919
    %v1015 = vunpack.c.h.b16 %v919
    %v1016 = vpack.c.b16 %v954, %v952
    %v1017 = vpack.c.b16 %v955, %v953
    %v1018 = vpack.c.b16 %v958, %v956
    %v1019 = vpack.c.b16 %v959, %v957
    %v1020 = vpack.c.b16 %v962, %v960
    %v1021 = vpack.c.b16 %v963, %v961
    %v1022 = vpack.c.b16 %v966, %v964
    %v1023 = vpack.c.b16 %v967, %v965
    %v1024 = vpack.c.b16 %v970, %v968
    %v1025 = vpack.c.b16 %v971, %v969
    %v1026 = vpack.c.b16 %v974, %v972
    %v1027 = vpack.c.b16 %v975, %v973
    %v1028 = vpack.c.b16 %v978, %v976
    %v1029 = vpack.c.b16 %v979, %v977
    %v1030 = vpack.c.b16 %v982, %v980
    %v1031 = vpack.c.b16 %v983, %v981
    %v1032 = vpack.c.b16 %v986, %v984
    %v1033 = vpack.c.b16 %v987, %v985
    %v1034 = vpack.c.b16 %v990, %v988
    %v1035 = vpack.c.b16 %v991, %v989
    %v1036 = vpack.c.b16 %v994, %v992
    %v1037 = vpack.c.b16 %v995, %v993
    %v1038 = vpack.c.b16 %v998, %v996
    %v1039 = vpack.c.b16 %v999, %v997
    %v1040 = vpack.c.b16 %v1002, %v1000
    %v1041 = vpack.c.b16 %v1003, %v1001
    %v1042 = vpack.c.b16 %v1006, %v1004
    %v1043 = vpack.c.b16 %v1007, %v1005
    %v1044 = vpack.c.b16 %v1010, %v1008
    %v1045 = vpack.c.b16 %v1011, %v1009
    %v1046 = vpack.c.b16 %v1014, %v1012
    %v1047 = vpack.c.b16 %v1015, %v1013
    %1080 = vmatprep.subr.bf16.mxu0 %v1017
    %1081 = vmatpush1.bf16.msra.mxu0 %v1016
    %1082 = vmatprep.subr.bf16.mxu0 %v1019
    %1083 = vmatpush1.bf16.msra.mxu0 %v1018
    %1084 = vmatprep.subr.bf16.mxu0 %v1021
    %1085 = vmatpush1.bf16.msra.mxu0 %v1020
    %1086 = vmatprep.subr.bf16.mxu0 %v1023
    %1087 = vmatpush1.bf16.msra.mxu0 %v1022
    %1088 = vmatprep.subr.bf16.mxu0 %v1025
    %1089 = vmatpush1.bf16.msra.mxu0 %v1024
    %1090 = vmatprep.subr.bf16.mxu0 %v1027
    %1091 = vmatpush1.bf16.msra.mxu0 %v1026
    %1092 = vmatprep.subr.bf16.mxu0 %v1029
    %1093 = vmatpush1.bf16.msra.mxu0 %v1028
    %1094 = vmatprep.subr.bf16.mxu0 %v1031
    %1095 = vmatpush1.bf16.msra.mxu0 %v1030
    %1096 = vmatprep.subr.bf16.mxu0 %v1033
    %1097 = vmatpush1.bf16.msra.mxu0 %v1032
    %1098 = vmatprep.subr.bf16.mxu0 %v1035
    %1099 = vmatpush1.bf16.msra.mxu0 %v1034
    %1100 = vmatprep.subr.bf16.mxu0 %v1037
    %1101 = vmatpush1.bf16.msra.mxu0 %v1036
    %1102 = vmatprep.subr.bf16.mxu0 %v1039
    %1103 = vmatpush1.bf16.msra.mxu0 %v1038
    %1104 = vmatprep.subr.bf16.mxu0 %v1041
    %1105 = vmatpush1.bf16.msra.mxu0 %v1040
    %1106 = vmatprep.subr.bf16.mxu0 %v1043
    %1107 = vmatpush1.bf16.msra.mxu0 %v1042
    %1108 = vmatprep.subr.bf16.mxu0 %v1045
    %1109 = vmatpush1.bf16.msra.mxu0 %v1044
    %1110 = vmatprep.subr.bf16.mxu0 %v1047
    %1111 = vmatpush1.bf16.msra.mxu0 %v1046
    %1112 = vmatprep.mubr.bf16.mxu0 %v887
    %1113 = vmatmul.mubr.bf16.gmra.mrb[0].mxu0 %v886
    %v1114 = vpop.f32.mrb[0].mxu0
    %v1115 = vadd.f32 0.0, %v1114
    %v1116 = vpop.f32.mrb[0].mxu0
    %v1117 = vadd.f32 0.0, %v1116
    %v1118 = vpop.f32.mrb[0].mxu0
    %v1119 = vadd.f32 0.0, %v1118
    %v1120 = vpop.f32.mrb[0].mxu0
    %v1121 = vadd.f32 0.0, %v1120
    %1122 = vdwg.mxu0
    %v1123 = vadd.f32 %v821, %v1115
    %v1124 = vadd.f32 %v825, %v1119
    %v1125 = vmax.f32 %v1123, 0.0
    %v1126 = vmax.f32 %v1124, 0.0
    %v1127 = vpack.c.bf16 %v1126, %v1125
    %v1128 = vld [vmem:[#allocation6] sm:$0xff]
    %v1129 = vld [vmem:[#allocation6 + $0x8] sm:$0xff]
    %v1130 = vld [vmem:[#allocation6 + $0x10] sm:$0xff]
    %v1131 = vld [vmem:[#allocation6 + $0x18] sm:$0xff]
    %v1132 = vld [vmem:[#allocation6 + $0x20] sm:$0xff]
    %v1133 = vld [vmem:[#allocation6 + $0x28] sm:$0xff]
    %v1134 = vld [vmem:[#allocation6 + $0x30] sm:$0xff]
    %v1135 = vld [vmem:[#allocation6 + $0x38] sm:$0xff]
    %v1136 = vld [vmem:[#allocation6 + $0x40] sm:$0xff]
    %v1137 = vld [vmem:[#allocation6 + $0x48] sm:$0xff]
    %v1138 = vld [vmem:[#allocation6 + $0x50] sm:$0xff]
    %v1139 = vld [vmem:[#allocation6 + $0x58] sm:$0xff]
    %v1140 = vld [vmem:[#allocation6 + $0x60] sm:$0xff]
    %v1141 = vld [vmem:[#allocation6 + $0x68] sm:$0xff]
    %v1142 = vld [vmem:[#allocation6 + $0x70] sm:$0xff]
    %v1143 = vld [vmem:[#allocation6 + $0x78] sm:$0xff]
    %v1160 = vunpack.c.l.b16 %v1128
    %v1161 = vunpack.c.h.b16 %v1128
    %v1162 = vunpack.c.l.b16 %v1129
    %v1163 = vunpack.c.h.b16 %v1129
    %v1164 = vunpack.c.l.b16 %v1130
    %v1165 = vunpack.c.h.b16 %v1130
    %v1166 = vunpack.c.l.b16 %v1131
    %v1167 = vunpack.c.h.b16 %v1131
    %v1168 = vunpack.c.l.b16 %v1132
    %v1169 = vunpack.c.h.b16 %v1132
    %v1170 = vunpack.c.l.b16 %v1133
    %v1171 = vunpack.c.h.b16 %v1133
    %v1172 = vunpack.c.l.b16 %v1134
    %v1173 = vunpack.c.h.b16 %v1134
    %v1174 = vunpack.c.l.b16 %v1135
    %v1175 = vunpack.c.h.b16 %v1135
    %v1176 = vunpack.c.l.b16 %v1136
    %v1177 = vunpack.c.h.b16 %v1136
    %v1178 = vunpack.c.l.b16 %v1137
    %v1179 = vunpack.c.h.b16 %v1137
    %v1180 = vunpack.c.l.b16 %v1138
    %v1181 = vunpack.c.h.b16 %v1138
    %v1182 = vunpack.c.l.b16 %v1139
    %v1183 = vunpack.c.h.b16 %v1139
    %v1184 = vunpack.c.l.b16 %v1140
    %v1185 = vunpack.c.h.b16 %v1140
    %v1186 = vunpack.c.l.b16 %v1141
    %v1187 = vunpack.c.h.b16 %v1141
    %v1188 = vunpack.c.l.b16 %v1142
    %v1189 = vunpack.c.h.b16 %v1142
    %v1190 = vunpack.c.l.b16 %v1143
    %v1191 = vunpack.c.h.b16 %v1143
    %v1192 = vpack.c.b16 %v1162, %v1160
    %v1193 = vpack.c.b16 %v1163, %v1161
    %v1194 = vpack.c.b16 %v1166, %v1164
    %v1195 = vpack.c.b16 %v1167, %v1165
    %v1196 = vpack.c.b16 %v1170, %v1168
    %v1197 = vpack.c.b16 %v1171, %v1169
    %v1198 = vpack.c.b16 %v1174, %v1172
    %v1199 = vpack.c.b16 %v1175, %v1173
    %v1200 = vpack.c.b16 %v1178, %v1176
    %v1201 = vpack.c.b16 %v1179, %v1177
    %v1202 = vpack.c.b16 %v1182, %v1180
    %v1203 = vpack.c.b16 %v1183, %v1181
    %v1204 = vpack.c.b16 %v1186, %v1184
    %v1205 = vpack.c.b16 %v1187, %v1185
    %v1206 = vpack.c.b16 %v1190, %v1188
    %v1207 = vpack.c.b16 %v1191, %v1189
    %1224 = vmatprep.subr.bf16.mxu0 %v1193
    %1225 = vmatpush1.bf16.msra.mxu0 %v1192
    %1226 = vmatprep.subr.bf16.mxu0 %v1195
    %1227 = vmatpush1.bf16.msra.mxu0 %v1194
    %1228 = vmatprep.subr.bf16.mxu0 %v1197
    %1229 = vmatpush1.bf16.msra.mxu0 %v1196
    %1230 = vmatprep.subr.bf16.mxu0 %v1199
    %1231 = vmatpush1.bf16.msra.mxu0 %v1198
    %1232 = vmatprep.subr.bf16.mxu0 %v1201
    %1233 = vmatpush1.bf16.msra.mxu0 %v1200
    %1234 = vmatprep.subr.bf16.mxu0 %v1203
    %1235 = vmatpush1.bf16.msra.mxu0 %v1202
    %1236 = vmatprep.subr.bf16.mxu0 %v1205
    %1237 = vmatpush1.bf16.msra.mxu0 %v1204
    %1238 = vmatprep.subr.bf16.mxu0 %v1207
    %1239 = vmatpush1.bf16.msra.mxu0 %v1206
    %1240 = vmatprep.subr.bf16.mxu0 0
    %1241 = vmatpush1.bf16.msra.mxu0 0
    %1242 = vmatprep.subr.bf16.mxu0 0
    %1243 = vmatpush1.bf16.msra.mxu0 0
    %1244 = vmatprep.subr.bf16.mxu0 0
    %1245 = vmatpush1.bf16.msra.mxu0 0
    %1246 = vmatprep.subr.bf16.mxu0 0
    %1247 = vmatpush1.bf16.msra.mxu0 0
    %1248 = vmatprep.subr.bf16.mxu0 0
    %1249 = vmatpush1.bf16.msra.mxu0 0
    %1250 = vmatprep.subr.bf16.mxu0 0
    %1251 = vmatpush1.bf16.msra.mxu0 0
    %1252 = vmatprep.subr.bf16.mxu0 0
    %1253 = vmatpush1.bf16.msra.mxu0 0
    %1254 = vmatprep.subr.bf16.mxu0 0
    %1255 = vmatpush1.bf16.msra.mxu0 0
    %1256 = vmatprep.mubr.bf16.mxu0 0
    %1257 = vmatmul.mubr.bf16.gmra.mrb[0].mxu0 %v1127
    %v1258 = vpop.f32.mrb[0].mxu0
    %v1259 = vadd.f32 0.0, %v1258
    %v1260 = vpop.f32.mrb[0].mxu0
    %v1261 = vadd.f32 0.0, %v1260
    %v1262 = vpop.f32.mrb[0].mxu0
    %v1263 = vadd.f32 0.0, %v1262
    %v1264 = vpop.f32.mrb[0].mxu0
    %v1265 = vadd.f32 0.0, %v1264
    %1266 = vdwg.mxu0
    %v1267 = vadd.f32 %v823, %v1259
    %v1268 = vadd.f32 %v827, %v1263
    %v1269 = vmax.f32 %v1267, 0.0
    %v1270 = vmax.f32 %v1268, 0.0
    %v1271 = vpack.c.bf16 %v1270, %v1269
    %v1272 = vadd.f32 %v864, %v1117
    %v1273 = vadd.f32 %v867, %v1121
    %v1274 = vadd.f32 %v1272, %v1261
    %v1275 = vadd.f32 %v1273, %v1265
    %v1276 = vld [vmem:[%s4] sm:$0xf]
    %v1277 = vld [vmem:[%s4 + $0x4] sm:$0xf]
    %v1278 = vld [vmem:[%s4 + $0x8] sm:$0xf]
    %v1279 = vld [vmem:[%s4 + $0xc] sm:$0xf]
    %v1280 = vld [vmem:[%s4 + $0x10] sm:$0xf]
    %v1281 = vld [vmem:[%s4 + $0x14] sm:$0xf]
    %v1282 = vld [vmem:[%s4 + $0x18] sm:$0xf]
    %v1283 = vld [vmem:[%s4 + $0x1c] sm:$0xf]
    %v1284 = vld [vmem:[%s4 + $0x20] sm:$0xf]
    %v1285 = vld [vmem:[%s4 + $0x24] sm:$0xf]
    %v1286 = vld [vmem:[%s4 + $0x28] sm:$0xf]
    %v1287 = vld [vmem:[%s4 + $0x2c] sm:$0xf]
    %v1288 = vld [vmem:[%s4 + $0x30] sm:$0xf]
    %v1289 = vld [vmem:[%s4 + $0x34] sm:$0xf]
    %v1290 = vld [vmem:[%s4 + $0x38] sm:$0xf]
    %v1291 = vld [vmem:[%s4 + $0x3c] sm:$0xf]
    %v1308 = vunpack.c.l.b16 %v1276
    %v1309 = vunpack.c.l.b16 %v1277
    %v1310 = vunpack.c.l.b16 %v1278
    %v1311 = vunpack.c.l.b16 %v1279
    %v1312 = vunpack.c.l.b16 %v1280
    %v1313 = vunpack.c.l.b16 %v1281
    %v1314 = vunpack.c.l.b16 %v1282
    %v1315 = vunpack.c.l.b16 %v1283
    %v1316 = vunpack.c.l.b16 %v1284
    %v1317 = vunpack.c.l.b16 %v1285
    %v1318 = vunpack.c.l.b16 %v1286
    %v1319 = vunpack.c.l.b16 %v1287
    %v1320 = vunpack.c.l.b16 %v1288
    %v1321 = vunpack.c.l.b16 %v1289
    %v1322 = vunpack.c.l.b16 %v1290
    %v1323 = vunpack.c.l.b16 %v1291
    %v1324 = vpack.c.b16 %v1309, %v1308
    %v1325 = vpack.c.b16 %v1311, %v1310
    %v1326 = vpack.c.b16 %v1313, %v1312
    %v1327 = vpack.c.b16 %v1315, %v1314
    %v1328 = vpack.c.b16 %v1317, %v1316
    %v1329 = vpack.c.b16 %v1319, %v1318
    %v1330 = vpack.c.b16 %v1321, %v1320
    %v1331 = vpack.c.b16 %v1323, %v1322
    %1340 = vmatprep.subr.bf16.mxu0 0
    %1341 = vmatpush1.bf16.msra.mxu0 %v1324
    %1342 = vmatprep.subr.bf16.mxu0 0
    %1343 = vmatpush1.bf16.msra.mxu0 %v1325
    %1344 = vmatprep.subr.bf16.mxu0 0
    %1345 = vmatpush1.bf16.msra.mxu0 %v1326
    %1346 = vmatprep.subr.bf16.mxu0 0
    %1347 = vmatpush1.bf16.msra.mxu0 %v1327
    %1348 = vmatprep.subr.bf16.mxu0 0
    %1349 = vmatpush1.bf16.msra.mxu0 %v1328
    %1350 = vmatprep.subr.bf16.mxu0 0
    %1351 = vmatpush1.bf16.msra.mxu0 %v1329
    %1352 = vmatprep.subr.bf16.mxu0 0
    %1353 = vmatpush1.bf16.msra.mxu0 %v1330
    %1354 = vmatprep.subr.bf16.mxu0 0
    %1355 = vmatpush1.bf16.msra.mxu0 %v1331
    %1356 = vmatprep.subr.bf16.mxu0 0
    %1357 = vmatpush1.bf16.msra.mxu0 0
    %1358 = vmatprep.subr.bf16.mxu0 0
    %1359 = vmatpush1.bf16.msra.mxu0 0
    %1360 = vmatprep.subr.bf16.mxu0 0
    %1361 = vmatpush1.bf16.msra.mxu0 0
    %1362 = vmatprep.subr.bf16.mxu0 0
    %1363 = vmatpush1.bf16.msra.mxu0 0
    %1364 = vmatprep.subr.bf16.mxu0 0
    %1365 = vmatpush1.bf16.msra.mxu0 0
    %1366 = vmatprep.subr.bf16.mxu0 0
    %1367 = vmatpush1.bf16.msra.mxu0 0
    %1368 = vmatprep.subr.bf16.mxu0 0
    %1369 = vmatpush1.bf16.msra.mxu0 0
    %1370 = vmatprep.subr.bf16.mxu0 0
    %1371 = vmatpush1.bf16.msra.mxu0 0
    %1372 = vmatprep.mubr.bf16.mxu0 0
    %1373 = vmatmul.mubr.bf16.gmra.mrb[0].mxu0 %v1271
    %v1374 = vpop.f32.mrb[0].mxu0
    %v1375 = vadd.f32 0.0, %v1374
    %v1376 = vpop.f32.mrb[0].mxu0
    %v1377 = vpop.f32.mrb[0].mxu0
    %v1378 = vadd.f32 0.0, %v1377
    %v1379 = vpop.f32.mrb[0].mxu0
    %1380 = vdwg.mxu0
    %v1381 = vadd.f32 %v1274, %v1375
    %v1382 = vadd.f32 %v1275, %v1378
    %1383 = vst [vmem:[%s5] sm:$0xff] %v1381
    %1384 = vst [vmem:[%s5 + $0x8] sm:$0xff] %v1382
    // Predicated region
    $region34: #{connect_four_forward.1} parent=1 // pred_check
      _
    $region35: #{connect_four_forward.1} parent=1 // pred_check_branch
      %1386 = sbr.rel (0) target = $region37
    $region36: #{connect_four_forward.1} parent=1 // pred_region
      _
    $region37: #{connect_four_forward.1} parent=1 // pred_fallthru
      _
    // Predicated region
    $region38: #{connect_four_forward.1} parent=1 // pred_check
      _
    $region39: #{connect_four_forward.1} parent=1 // pred_check_branch
      %1388 = sbr.rel (0) target = $region41
    $region40: #{connect_four_forward.1} parent=1 // pred_region
      _
    $region41: #{connect_four_forward.1} parent=1 // pred_fallthru
      _
    %1389 = vsyncpa [#allocation3], 1
    %1390 = vsyncpa [#allocation5], 1

</llo_original>
